<compile_context>
chip_gen: v7x
topology: tpu7x:2x2x1
jax: 0.10.0
libtpu: 0.0.40
codegen_flags: <defaults>
</compile_context>

<pallas_src>
import functools

import jax
import jax.numpy as jnp
from jax.experimental import pallas as pl
from jax.experimental.pallas import tpu as pltpu


def _groupnorm_kernel(x_ref, gamma_ref, beta_ref, o_ref, *, eps, valid, padded):
    # x_ref block:    (NB, G, Lp) -- NB images, all groups, flattened Cg*HW (+pad)
    # gamma/beta ref: (G, Lp)     -- per-channel affine pre-expanded over HW
    x = x_ref[...].astype(jnp.float32)  # (NB, G, Lp)

    if padded > valid:
        # Zero-padded lanes must not contribute to the statistics.
        lane = jax.lax.broadcasted_iota(jnp.int32, x.shape, dimension=2)
        mask = (lane < valid).astype(jnp.float32)
        x_sum_src = x * mask
    else:
        mask = None
        x_sum_src = x

    inv_count = 1.0 / float(valid)
    mean = jnp.sum(x_sum_src, axis=-1, keepdims=True) * inv_count  # (NB, G, 1)
    centered = x - mean
    centered_m = centered * mask if mask is not None else centered
    var = jnp.sum(centered_m * centered_m, axis=-1, keepdims=True) * inv_count
    inv = jax.lax.rsqrt(var + eps)  # (NB, G, 1)  -> EUP rsqrt

    gamma = gamma_ref[...].astype(jnp.float32)  # (G, Lp) broadcasts to (NB, G, Lp)
    beta = beta_ref[...].astype(jnp.float32)

    # Single fused normalize + affine + cast store pass.
    o_ref[...] = ((centered * inv) * gamma + beta).astype(o_ref.dtype)


def group_norm(x, gamma, beta, *, num_groups=16, eps=1e-6):
    """GroupNorm forward. x: (N, C, H, W), gamma/beta: (C,)."""
    N, C, H, W = x.shape
    G = num_groups
    assert C % G == 0, "channels must be divisible by num_groups"
    Cg = C // G
    HW = H * W
    L = Cg * HW                    # per-group element count (valid)
    pad = (-L) % 128               # pad lane dim to a multiple of 128
    Lp = L + pad

    # TODO(synk): for very large H*W (per-image block approaching the VMEM
    # budget, hit first on v7x's 64 MiB), add a chunked-reduction path over a
    # second 'arbitrary' grid axis with sum / sum-of-squares scratch.

    x_r = x.reshape(N, G, L)
    if pad:
        x_r = jnp.pad(x_r, ((0, 0), (0, 0), (0, pad)))

    # Pre-expand per-channel affine to (G, Lp): tiny, done once outside the
    # kernel; constant index_map => DMA'd once, resident across grid steps.
    gamma_r = jnp.repeat(gamma.reshape(G, Cg), HW, axis=1)
    beta_r = jnp.repeat(beta.reshape(G, Cg), HW, axis=1)
    if pad:
        gamma_r = jnp.pad(gamma_r, ((0, 0), (0, pad)))
        beta_r = jnp.pad(beta_r, ((0, 0), (0, pad)))

    itemsize = jnp.dtype(x.dtype).itemsize
    per_img_bytes = G * Lp * itemsize
    # ~2 MiB blocks, but keep at least 2 grid steps when N > 1 (megacore).
    nb_target = max(1, (2 << 20) // per_img_bytes)
    NB = max(1, min(nb_target, pl.cdiv(N, 2)))
    n_pad = (-N) % NB
    if n_pad:
        # Zero-padded images yield finite (garbage) outputs; sliced off below.
        x_r = jnp.pad(x_r, ((0, n_pad), (0, 0), (0, 0)))
    Np = N + n_pad

    # Explicit VMEM budget: in + out double-buffered blocks + resident
    # gamma/beta, clamped so it is safe on v7x's 64 MiB VMEM.
    aff_itemsize = jnp.dtype(gamma.dtype).itemsize
    needed = 4 * NB * per_img_bytes + 2 * G * Lp * aff_itemsize + (2 << 20)
    vmem_limit = int(min(64 << 20, max(needed, 16 << 20)))

    out = pl.pallas_call(
        functools.partial(_groupnorm_kernel, eps=eps, valid=L, padded=Lp),
        out_shape=jax.ShapeDtypeStruct((Np, G, Lp), x.dtype),
        grid_spec=pltpu.PrefetchScalarGridSpec(
            num_scalar_prefetch=0,
            grid=(Np // NB,),
            in_specs=[
                pl.BlockSpec((NB, G, Lp), lambda n: (n, 0, 0)),
                pl.BlockSpec((G, Lp), lambda n: (0, 0)),
                pl.BlockSpec((G, Lp), lambda n: (0, 0)),
            ],
            out_specs=pl.BlockSpec((NB, G, Lp), lambda n: (n, 0, 0)),
        ),
        compiler_params=pltpu.CompilerParams(
            dimension_semantics=("parallel",),
            vmem_limit_bytes=vmem_limit,
        ),
    )(x_r, gamma_r, beta_r)

    if n_pad:
        out = out[:N]
    if pad:
        out = out[:, :, :L]
    return out.reshape(N, C, H, W)


def group_norm_ref(x, gamma, beta, *, num_groups=16, eps=1e-6):
    """Pure-JAX reference matching torch.nn.GroupNorm semantics."""
    N, C, H, W = x.shape
    G = num_groups
    xr = x.reshape(N, G, -1).astype(jnp.float32)
    mean = jnp.mean(xr, axis=-1, keepdims=True)
    var = jnp.mean((xr - mean) ** 2, axis=-1, keepdims=True)
    xn = (xr - mean) / jnp.sqrt(var + eps)
    xn = xn.reshape(N, C, H, W)
    return (xn * gamma.reshape(1, C, 1, 1) + beta.reshape(1, C, 1, 1)).astype(x.dtype)


if __name__ == "__main__":
    # Module config: channels=32, num_groups=16 (default), eps=1e-6 (default)
    N, C, H, W = 2, 32, 16, 16
    G = 16
    eps = 1e-6

    key = jax.random.PRNGKey(0)
    kx, kg, kb = jax.random.split(key, 3)
    x = jax.random.normal(kx, (N, C, H, W), dtype=jnp.float32)
    # Deterministic non-trivial affine params (torch default init is 1 / 0).
    gamma = jax.random.normal(kg, (C,), dtype=jnp.float32) * 0.1 + 1.0
    beta = jax.random.normal(kb, (C,), dtype=jnp.float32) * 0.1

    out = group_norm(x, gamma, beta, num_groups=G, eps=eps)
    out = jax.block_until_ready(out)

    ref = group_norm_ref(x, gamma, beta, num_groups=G, eps=eps)
    assert out.shape == (N, C, H, W)
    assert jnp.allclose(out, ref, atol=1e-5, rtol=1e-5)

    print("KERNEL_OK")
</pallas_src>

<mosaic_0001>
module attributes {stable_mosaic.version = 11 : i64} {
  func.func @_groupnorm_kernel(%arg0: i32, %arg1: memref<1x16x512xf32, #tpu.memory_space<vmem>>, %arg2: memref<16x512xf32, #tpu.memory_space<vmem>>, %arg3: memref<16x512xf32, #tpu.memory_space<vmem>>, %arg4: memref<1x16x512xf32, #tpu.memory_space<vmem>>) attributes {dimension_semantics = [#tpu.dimension_semantics<parallel>], iteration_bounds = array<i64: 2>, scalar_prefetch = 0 : i64, scratch_operands = 0 : i64, tpu.core_type = #tpu.core_type<tc>, window_params = [{transform_indices = @transform_0, window_bounds = array<i64: 1, 16, 512>}, {pipeline_mode = #tpu.pipeline_mode<synchronous>, transform_indices = @transform_1, window_bounds = array<i64: 16, 512>}, {pipeline_mode = #tpu.pipeline_mode<synchronous>, transform_indices = @transform_2, window_bounds = array<i64: 16, 512>}, {transform_indices = @transform_3, window_bounds = array<i64: 1, 16, 512>}]} {
    %c0 = arith.constant 0 : index
    %c0_0 = arith.constant 0 : index
    %c0_1 = arith.constant 0 : index
    %0 = vector.load %arg1[%c0, %c0_0, %c0_1] : memref<1x16x512xf32, #tpu.memory_space<vmem>>, vector<1x16x512xf32>
    %cst = arith.constant dense<0.000000e+00> : vector<1x16xf32>
    %1 = vector.multi_reduction <add>, %0, %cst [2] : vector<1x16x512xf32> to vector<1x16xf32>
    %2 = vector.shape_cast %1 : vector<1x16xf32> to vector<1x16x1xf32>
    %cst_2 = arith.constant 0.001953125 : f32
    %3 = vector.broadcast %cst_2 : f32 to vector<1x16x1xf32>
    %4 = arith.mulf %2, %3 : vector<1x16x1xf32>
    %5 = vector.broadcast %4 : vector<1x16x1xf32> to vector<1x16x512xf32>
    %6 = arith.subf %0, %5 : vector<1x16x512xf32>
    %7 = arith.mulf %6, %6 : vector<1x16x512xf32>
    %cst_3 = arith.constant dense<0.000000e+00> : vector<1x16xf32>
    %8 = vector.multi_reduction <add>, %7, %cst_3 [2] : vector<1x16x512xf32> to vector<1x16xf32>
    %9 = vector.shape_cast %8 : vector<1x16xf32> to vector<1x16x1xf32>
    %cst_4 = arith.constant 0.001953125 : f32
    %10 = vector.broadcast %cst_4 : f32 to vector<1x16x1xf32>
    %11 = arith.mulf %9, %10 : vector<1x16x1xf32>
    %cst_5 = arith.constant 9.99999997E-7 : f32
    %12 = vector.broadcast %cst_5 : f32 to vector<1x16x1xf32>
    %13 = arith.addf %11, %12 : vector<1x16x1xf32>
    %14 = math.rsqrt %13 : vector<1x16x1xf32>
    %c0_6 = arith.constant 0 : index
    %c0_7 = arith.constant 0 : index
    %15 = vector.load %arg2[%c0_6, %c0_7] : memref<16x512xf32, #tpu.memory_space<vmem>>, vector<16x512xf32>
    %c0_8 = arith.constant 0 : index
    %c0_9 = arith.constant 0 : index
    %16 = vector.load %arg3[%c0_8, %c0_9] : memref<16x512xf32, #tpu.memory_space<vmem>>, vector<16x512xf32>
    %17 = vector.broadcast %14 : vector<1x16x1xf32> to vector<1x16x512xf32>
    %18 = arith.mulf %6, %17 : vector<1x16x512xf32>
    %19 = vector.shape_cast %15 : vector<16x512xf32> to vector<1x16x512xf32>
    %20 = arith.mulf %18, %19 : vector<1x16x512xf32>
    %21 = vector.shape_cast %16 : vector<16x512xf32> to vector<1x16x512xf32>
    %22 = arith.addf %20, %21 : vector<1x16x512xf32>
    %c0_10 = arith.constant 0 : index
    %c0_11 = arith.constant 0 : index
    %c0_12 = arith.constant 0 : index
    %23 = vector.load %arg4[%c0_10, %c0_11, %c0_12] : memref<1x16x512xf32, #tpu.memory_space<vmem>>, vector<1x16x512xf32>
    tpu.vector_store %arg4[%c0_10, %c0_11, %c0_12], %22 {strides = array<i32>} : memref<1x16x512xf32, #tpu.memory_space<vmem>>, vector<1x16x512xf32>,
    return
  }
  func.func @transform_0(%arg0: i32) -> (i32, i32, i32) {
    %c0_i32 = arith.constant 0 : i32
    %c0_i32_0 = arith.constant 0 : i32
    %c0_i32_1 = arith.constant 0 : i32
    return %arg0, %c0_i32, %c0_i32_0 : i32, i32, i32
  }
  func.func @transform_1(%arg0: i32) -> (i32, i32) {
    %c0_i32 = arith.constant 0 : i32
    %c0_i32_0 = arith.constant 0 : i32
    %c0_i32_1 = arith.constant 0 : i32
    return %c0_i32, %c0_i32_0 : i32, i32
  }
  func.func @transform_2(%arg0: i32) -> (i32, i32) {
    %c0_i32 = arith.constant 0 : i32
    %c0_i32_0 = arith.constant 0 : i32
    %c0_i32_1 = arith.constant 0 : i32
    return %c0_i32, %c0_i32_0 : i32, i32
  }
  func.func @transform_3(%arg0: i32) -> (i32, i32, i32) {
    %c0_i32 = arith.constant 0 : i32
    %c0_i32_0 = arith.constant 0 : i32
    %c0_i32_1 = arith.constant 0 : i32
    return %arg0, %c0_i32, %c0_i32_0 : i32, i32, i32
  }
}

</mosaic_0001>

<llo_original>
// kernel: tpu_custom_call.1
$region0: #{tpu_custom_call.1}
  #allocation0 [shape = 'u32[]', space=smem, size = 0x4, offset = 0x4, fixed_abs, tag = 'smem constant byte address 0x4 - core index']
  #allocation1 [shape = 'u32[144,128]{1,0:T(1,128)}', space=vmem, size = 0x12000, scoped, tag = 'internal scratch']
  %s0 = inlined_call_operand.hbm [shape: f32[2,16,512], index: 0, kind: input, shape index: {}]
  %s1 = inlined_call_operand.hbm [shape: f32[16,512], index: 1, kind: input, shape index: {}]
  %s2 = inlined_call_operand.hbm [shape: f32[16,512], index: 2, kind: input, shape index: {}]
  %s3 = inlined_call_operand.hbm [shape: f32[2,16,512], index: 3, kind: output, shape index: {}]
  %s4 = sld [smem:[#allocation0]]
  $region57: #{tpu_custom_call.1} parent=0
    _
  %s6 = ssub.s32 1, %s4
  %s7 = scalar_select 0, %s6, %s4
  $region1: #{tpu_custom_call.1} parent=0
    #allocation2 [shape = 'u8[65536]{0}', space=vmem, size = 0x10000, scoped, tag = 'input window, operand 0']
    #allocation3 [shape = 's32[2]{0}', space=sflag, size = 0x8, scoped, tag = 'scoped memory for tpu_custom_call.1']
    #allocation4 [shape = 's32[2]{0}', space=sflag, size = 0x8, scoped, tag = 'scoped memory for tpu_custom_call.1']
    #allocation5 [shape = 'u8[32768]{0}', space=vmem, size = 0x8000, scoped, tag = 'input window, operand 1, single buffered']
    #allocation6 [shape = 's32[1]{0}', space=sflag, size = 0x4, scoped, tag = 'scoped memory for tpu_custom_call.1']
    #allocation7 [shape = 'u8[32768]{0}', space=vmem, size = 0x8000, scoped, tag = 'input window, operand 2, single buffered']
    #allocation8 [shape = 'u8[65536]{0}', space=vmem, size = 0x10000, scoped, tag = 'output window, operand 0']
    %8 = vsyncpa [#allocation3], 0
    %s9 = scalar_lea.sflag [#allocation3], 1
    %10 = vsyncpa %s9, 0
    %11 = vsyncpa [#allocation6], 0
    %12 = vsyncpa [#allocation4], 0
    %s13 = scalar_lea.sflag [#allocation4], 1
    %14 = vsyncpa %s13, 0
    loop: start=0, step=1, limit=4
    $region2: #{tpu_custom_call.1} parent=1 // loop_pre_header
      _
    $region3: #{tpu_custom_call.1} parent=1 // loop_header
      %s16 = sphi 0, %s20
      %p17 = scmp.ge.s32.totalorder %s16, 4
      %s26 = sphi 0, %s28
      %s29 = sphi 0, %s26
      %s30 = sphi 0, %s29
      %s46 = sphi 0, %s30
      %s50 = sphi 0, %s50
      %s52 = sphi 0, %s50
      %s53 = sphi 0, %s52
      %s67 = sphi 0, %s53
      %s71 = sphi 0, %s71
      %s73 = sphi 0, %s71
      %s74 = sphi 0, %s73
      %s88 = sphi 0, %s74
      %s94 = sphi 0, %s96
      %s97 = sphi 0, %s94
      %s98 = sphi 0, %s97
      %s114 = sphi 0, %s98
    $region4: #{tpu_custom_call.1} parent=1 // loop_header_branch
      %19 = sbr.rel (%p17) target = $region8
    $region5: #{tpu_custom_call.1} parent=1 // loop_body
      %s21 = ssub.s32 %s16, 1
      %s22 = ssub.s32 %s16, 2
      %s23 = sadd.s32 %s16, 1
      %s24 = ssub.s32 %s16, %s23
      %p25 = scmp.eq.s32.totalorder %s24, 0
      %s27 = sadd.s32 %s26, 1
      %s28 = scalar_select %p25, %s26, %s27
      %p31 = pneg %p25
      %p32 = scmp.eq.s32.totalorder %s16, 1
      %p33 = por %p31, %p32
      %p34 = scmp.ne.s32.totalorder %s26, %s29
      %p35 = scmp.eq.s32.totalorder %s16, 0
      %p36 = por %p34, %p35
      %p37 = scmp.ne.s32.totalorder %s26, %s29
      %p38 = scmp.eq.s32.totalorder %s21, 1
      %p39 = por %p37, %p38
      %p40 = scmp.ne.s32.totalorder %s29, %s30
      %p41 = scmp.eq.s32.totalorder %s21, 0
      %p42 = por %p40, %p41
      %p43 = scmp.ne.s32.totalorder %s29, %s30
      %p44 = scmp.eq.s32.totalorder %s22, 1
      %p45 = por %p43, %p44
      %p47 = scmp.ne.s32.totalorder %s30, %s46
      %p48 = scmp.eq.s32.totalorder %s22, 0
      %p49 = por %p47, %p48
      %s51 = sadd.s32 %s50, 1
      %p54 = scmp.eq.s32.totalorder %s16, 1
      %p55 = scmp.ne.s32.totalorder %s50, %s52
      %p56 = scmp.eq.s32.totalorder %s16, 0
      %p57 = por %p55, %p56
      %p58 = scmp.ne.s32.totalorder %s50, %s52
      %p59 = scmp.eq.s32.totalorder %s21, 1
      %p60 = por %p58, %p59
      %p61 = scmp.ne.s32.totalorder %s52, %s53
      %p62 = scmp.eq.s32.totalorder %s21, 0
      %p63 = por %p61, %p62
      %p64 = scmp.ne.s32.totalorder %s52, %s53
      %p65 = scmp.eq.s32.totalorder %s22, 1
      %p66 = por %p64, %p65
      %p68 = scmp.ne.s32.totalorder %s53, %s67
      %p69 = scmp.eq.s32.totalorder %s22, 0
      %p70 = por %p68, %p69
      %s72 = sadd.s32 %s71, 1
      %p75 = scmp.eq.s32.totalorder %s16, 1
      %p76 = scmp.ne.s32.totalorder %s71, %s73
      %p77 = scmp.eq.s32.totalorder %s16, 0
      %p78 = por %p76, %p77
      %p79 = scmp.ne.s32.totalorder %s71, %s73
      %p80 = scmp.eq.s32.totalorder %s21, 1
      %p81 = por %p79, %p80
      %p82 = scmp.ne.s32.totalorder %s73, %s74
      %p83 = scmp.eq.s32.totalorder %s21, 0
      %p84 = por %p82, %p83
      %p85 = scmp.ne.s32.totalorder %s73, %s74
      %p86 = scmp.eq.s32.totalorder %s22, 1
      %p87 = por %p85, %p86
      %p89 = scmp.ne.s32.totalorder %s74, %s88
      %p90 = scmp.eq.s32.totalorder %s22, 0
      %p91 = por %p89, %p90
      %s92 = ssub.s32 %s16, %s23
      %p93 = scmp.eq.s32.totalorder %s92, 0
      %s95 = sadd.s32 %s94, 1
      %s96 = scalar_select %p93, %s94, %s95
      %p99 = pneg %p93
      %p100 = scmp.eq.s32.totalorder %s16, 1
      %p101 = por %p99, %p100
      %p102 = scmp.ne.s32.totalorder %s94, %s97
      %p103 = scmp.eq.s32.totalorder %s16, 0
      %p104 = por %p102, %p103
      %p105 = scmp.ne.s32.totalorder %s94, %s97
      %p106 = scmp.eq.s32.totalorder %s21, 1
      %p107 = por %p105, %p106
      %p108 = scmp.ne.s32.totalorder %s97, %s98
      %p109 = scmp.eq.s32.totalorder %s21, 0
      %p110 = por %p108, %p109
      %p111 = scmp.ne.s32.totalorder %s97, %s98
      %p112 = scmp.eq.s32.totalorder %s22, 1
      %p113 = por %p111, %p112
      %p115 = scmp.ne.s32.totalorder %s98, %s114
      %p116 = scmp.eq.s32.totalorder %s22, 0
      %p117 = por %p115, %p116
      %p118 = scmp.le.s32.totalorder 1, %s16
      %p119 = scmp.lt.s32.totalorder %s16, 3
      %p120 = pnand %p118, %p119
      %p121 = pneg %p120
      // Predicated region
      $region9: #{tpu_custom_call.1} parent=5 // pred_check
        _
      $region10: #{tpu_custom_call.1} parent=5 // pred_check_branch
        %123 = sbr.rel (%p120) target = $region12
      $region11: #{tpu_custom_call.1} parent=5 // pred_region
        %s124 = ssub.s32 %s16, 1
        // Predicated region
        $region13: #{tpu_custom_call.1} parent=11 // pred_check
          %p125 = pneg %p63
        $region14: #{tpu_custom_call.1} parent=11 // pred_check_branch
          %127 = sbr.rel (%p125) target = $region16
        $region15: #{tpu_custom_call.1} parent=11 // pred_region
          %s129 = ssub.s32 1024, 1024
          %130 = vsyncadd [#allocation6], %s129
          %s131 = sshll.u32 [#allocation5], 4
          %s132 = int_to_ptr.vmem [resolvable:$true] %s131
          %137 = dma.hbm_to_vmem [thread:$0]  %s1, 1024, %s132, [#allocation6], 512, 512, 32
        $region16: #{tpu_custom_call.1} parent=11 // pred_fallthru
          _
        // Predicated region
        $region17: #{tpu_custom_call.1} parent=11 // pred_check
          %p138 = pneg %p84
        $region18: #{tpu_custom_call.1} parent=11 // pred_check_branch
          %140 = sbr.rel (%p138) target = $region20
        $region19: #{tpu_custom_call.1} parent=11 // pred_region
          %s142 = ssub.s32 1024, 1024
          %143 = vsyncadd [#allocation6], %s142
          %s144 = sshll.u32 [#allocation7], 4
          %s145 = int_to_ptr.vmem [resolvable:$true] %s144
          %150 = dma.hbm_to_vmem [thread:$0]  %s2, 1024, %s145, [#allocation6], 512, 512, 32
        $region20: #{tpu_custom_call.1} parent=11 // pred_fallthru
          _
      $region12: #{tpu_custom_call.1} parent=5 // pred_fallthru
        _
      %p151 = scmp.lt.s32.totalorder %s16, 2
      // Predicated region
      $region21: #{tpu_custom_call.1} parent=5 // pred_check
        %p152 = pneg %p151
      $region22: #{tpu_custom_call.1} parent=5 // pred_check_branch
        %154 = sbr.rel (%p152) target = $region24
      $region23: #{tpu_custom_call.1} parent=5 // pred_region
        // Predicated region
        $region25: #{tpu_custom_call.1} parent=23 // pred_check
          %p155 = pneg %p36
        $region26: #{tpu_custom_call.1} parent=23 // pred_check_branch
          %157 = sbr.rel (%p155) target = $region28
        $region27: #{tpu_custom_call.1} parent=23 // pred_region
          %s158 = sand.u32 %s26, 1
          %s159 = scalar_lea.sflag [#allocation3], %s158
          %s160 = sand.u32 %s26, 1
          %s161 = smul.addr %s160, 64
          %s162 = scalar_lea.vmem [#allocation2], %s161
          %s164 = ssub.s32 1024, 1024
          %165 = vsyncadd %s159, %s164
          %s166 = smul.addr %s16, 8
          %s167 = smul.addr %s166, 128
          %s168 = scalar_lea.hbm %s0, %s167
          %s169 = sshll.u32 %s162, 4
          %s170 = int_to_ptr.vmem [resolvable:$true] %s169
          %175 = dma.hbm_to_vmem [thread:$0]  %s168, 1024, %s170, %s159, 512, 512, 32
        $region28: #{tpu_custom_call.1} parent=23 // pred_fallthru
          _
      $region24: #{tpu_custom_call.1} parent=5 // pred_fallthru
        _
      %p176 = scmp.le.s32.totalorder 1, %s16
      %p177 = scmp.lt.s32.totalorder %s16, 3
      %p178 = pnand %p176, %p177
      %p179 = pneg %p178
      // Predicated region
      $region29: #{tpu_custom_call.1} parent=5 // pred_check
        _
      $region30: #{tpu_custom_call.1} parent=5 // pred_check_branch
        %181 = sbr.rel (%p178) target = $region32
      $region31: #{tpu_custom_call.1} parent=5 // pred_region
        %s182 = ssub.s32 %s16, 1
        %s183 = sand.u32 %s29, 1
        %s184 = scalar_lea.sflag [#allocation3], %s183
        %s185 = sand.u32 %s29, 1
        %s186 = smul.addr %s185, 64
        %s187 = scalar_lea.vmem [#allocation2], %s186
        // Predicated region
        $region33: #{tpu_custom_call.1} parent=31 // pred_check
          %p188 = pneg %p42
        $region34: #{tpu_custom_call.1} parent=31 // pred_check_branch
          %190 = sbr.rel (%p188) target = $region36
        $region35: #{tpu_custom_call.1} parent=31 // pred_region
          %191 = dma.done %s184, 1024
        $region36: #{tpu_custom_call.1} parent=31 // pred_fallthru
          _
        // Predicated region
        $region37: #{tpu_custom_call.1} parent=31 // pred_check
          %p192 = pneg %p63
        $region38: #{tpu_custom_call.1} parent=31 // pred_check_branch
          %194 = sbr.rel (%p192) target = $region40
        $region39: #{tpu_custom_call.1} parent=31 // pred_region
          %195 = dma.done [#allocation6], 1024
        $region40: #{tpu_custom_call.1} parent=31 // pred_fallthru
          _
        // Predicated region
        $region41: #{tpu_custom_call.1} parent=31 // pred_check
          %p196 = pneg %p84
        $region42: #{tpu_custom_call.1} parent=31 // pred_check_branch
          %198 = sbr.rel (%p196) target = $region44
        $region43: #{tpu_custom_call.1} parent=31 // pred_region
          %199 = dma.done [#allocation6], 1024
        $region44: #{tpu_custom_call.1} parent=31 // pred_fallthru
          _
        %s200 = sand.u32 %s29, 1
        %s201 = scalar_lea.sflag [#allocation3], %s200
        %s202 = sand.u32 %s29, 1
        %s203 = smul.addr %s202, 64
        %s204 = scalar_lea.vmem [#allocation2], %s203
        %p205 = pneg %p42
        %p206 = pneg %p39
        %p207 = pneg %p63
        %p208 = pneg %p60
        %p209 = pneg %p84
        %p210 = pneg %p81
        %p211 = pneg %p110
        %p212 = pneg %p107
        %s213 = sand.u32 %s97, 1
        %s214 = scalar_lea.sflag [#allocation4], %s213
        %s215 = sand.u32 %s97, 1
        %s216 = smul.addr %s215, 64
        %s217 = scalar_lea.vmem [#allocation8], %s216
        %v218 = vld [vmem:[%s187] sm:$0xff]
        %v219 = vld [vmem:[%s187 + $0x8] sm:$0xff]
        %v220 = vld [vmem:[%s187 + $0x10] sm:$0xff]
        %v221 = vld [vmem:[%s187 + $0x18] sm:$0xff]
        %v222 = vld [vmem:[%s187 + $0x20] sm:$0xff]
        %v223 = vld [vmem:[%s187 + $0x28] sm:$0xff]
        %v224 = vld [vmem:[%s187 + $0x30] sm:$0xff]
        %v225 = vld [vmem:[%s187 + $0x38] sm:$0xff]
        %v226 = vadd.f32 %v218, %v219
        %v227 = vadd.f32 %v226, %v220
        %v228 = vadd.f32 %v227, %v221
        %229 = vadd.xlane.f32.xlu0 %v228
        %v230 = vpop.xlane.xlu0 %229
        %v231 = vadd.f32 %v222, %v223
        %v232 = vadd.f32 %v231, %v224
        %v233 = vadd.f32 %v232, %v225
        %234 = vadd.xlane.f32.xlu0 %v233
        %v235 = vpop.xlane.xlu0 %234
        %v236 = vmul.f32 %v230, 0.001953125
        %v237 = vmul.f32 %v235, 0.001953125
        %v238 = vsub.f32 %v218, %v236
        %v239 = vsub.f32 %v219, %v236
        %v240 = vsub.f32 %v220, %v236
        %v241 = vsub.f32 %v221, %v236
        %v242 = vsub.f32 %v222, %v237
        %v243 = vsub.f32 %v223, %v237
        %v244 = vsub.f32 %v224, %v237
        %v245 = vsub.f32 %v225, %v237
        %v246 = vmul.f32 %v238, %v238
        %v247 = vmul.f32 %v239, %v239
        %v248 = vmul.f32 %v240, %v240
        %v249 = vmul.f32 %v241, %v241
        %v250 = vmul.f32 %v242, %v242
        %v251 = vmul.f32 %v243, %v243
        %v252 = vmul.f32 %v244, %v244
        %v253 = vmul.f32 %v245, %v245
        %v254 = vadd.f32 %v246, %v247
        %v255 = vadd.f32 %v254, %v248
        %v256 = vadd.f32 %v255, %v249
        %257 = vadd.xlane.f32.xlu0 %v256
        %v258 = vpop.xlane.xlu0 %257
        %v259 = vadd.f32 %v250, %v251
        %v260 = vadd.f32 %v259, %v252
        %v261 = vadd.f32 %v260, %v253
        %262 = vadd.xlane.f32.xlu0 %v261
        %v263 = vpop.xlane.xlu0 %262
        %v264 = vmul.f32 %v258, 0.001953125
        %v265 = vmul.f32 %v263, 0.001953125
        %v266 = vadd.f32 %v264, 1e-06
        %v267 = vadd.f32 %v265, 1e-06
        %v268 = vrsqrt.pop %v266
        %v269 = vrsqrt.pop %v267
        %v270 = vld [vmem:[#allocation5] sm:$0xff]
        %v271 = vld [vmem:[#allocation5 + $0x8] sm:$0xff]
        %v272 = vld [vmem:[#allocation5 + $0x10] sm:$0xff]
        %v273 = vld [vmem:[#allocation5 + $0x18] sm:$0xff]
        %v274 = vld [vmem:[#allocation5 + $0x20] sm:$0xff]
        %v275 = vld [vmem:[#allocation5 + $0x28] sm:$0xff]
        %v276 = vld [vmem:[#allocation5 + $0x30] sm:$0xff]
        %v277 = vld [vmem:[#allocation5 + $0x38] sm:$0xff]
        %v278 = vld [vmem:[#allocation7] sm:$0xff]
        %v279 = vld [vmem:[#allocation7 + $0x8] sm:$0xff]
        %v280 = vld [vmem:[#allocation7 + $0x10] sm:$0xff]
        %v281 = vld [vmem:[#allocation7 + $0x18] sm:$0xff]
        %v282 = vld [vmem:[#allocation7 + $0x20] sm:$0xff]
        %v283 = vld [vmem:[#allocation7 + $0x28] sm:$0xff]
        %v284 = vld [vmem:[#allocation7 + $0x30] sm:$0xff]
        %v285 = vld [vmem:[#allocation7 + $0x38] sm:$0xff]
        %v286 = vmul.f32 %v238, %v268
        %v287 = vmul.f32 %v239, %v268
        %v288 = vmul.f32 %v240, %v268
        %v289 = vmul.f32 %v241, %v268
        %v290 = vmul.f32 %v242, %v269
        %v291 = vmul.f32 %v243, %v269
        %v292 = vmul.f32 %v244, %v269
        %v293 = vmul.f32 %v245, %v269
        %v294 = vmul.f32 %v286, %v270
        %v295 = vmul.f32 %v287, %v271
        %v296 = vmul.f32 %v288, %v272
        %v297 = vmul.f32 %v289, %v273
        %v298 = vmul.f32 %v290, %v274
        %v299 = vmul.f32 %v291, %v275
        %v300 = vmul.f32 %v292, %v276
        %v301 = vmul.f32 %v293, %v277
        %v302 = vadd.f32 %v294, %v278
        %v303 = vadd.f32 %v295, %v279
        %v304 = vadd.f32 %v296, %v280
        %v305 = vadd.f32 %v297, %v281
        %v306 = vadd.f32 %v298, %v282
        %v307 = vadd.f32 %v299, %v283
        %v308 = vadd.f32 %v300, %v284
        %v309 = vadd.f32 %v301, %v285
        %310 = vst [vmem:[%s217] sm:$0xff] %v302
        %311 = vst [vmem:[%s217 + $0x8] sm:$0xff] %v303
        %312 = vst [vmem:[%s217 + $0x10] sm:$0xff] %v304
        %313 = vst [vmem:[%s217 + $0x18] sm:$0xff] %v305
        %314 = vst [vmem:[%s217 + $0x20] sm:$0xff] %v306
        %315 = vst [vmem:[%s217 + $0x28] sm:$0xff] %v307
        %316 = vst [vmem:[%s217 + $0x30] sm:$0xff] %v308
        %317 = vst [vmem:[%s217 + $0x38] sm:$0xff] %v309
        %s318 = sand.u32 %s97, 1
        %s319 = scalar_lea.sflag [#allocation4], %s318
        %s320 = sand.u32 %s97, 1
        %s321 = smul.addr %s320, 64
        %s322 = scalar_lea.vmem [#allocation8], %s321
        // Predicated region
        $region45: #{tpu_custom_call.1} parent=31 // pred_check
          %p323 = pneg %p107
        $region46: #{tpu_custom_call.1} parent=31 // pred_check_branch
          %325 = sbr.rel (%p323) target = $region48
        $region47: #{tpu_custom_call.1} parent=31 // pred_region
          %s327 = ssub.s32 1024, 1024
          %328 = vsyncadd %s319, %s327
          %s329 = smul.addr %s21, 8
          %s330 = smul.addr %s329, 128
          %s331 = scalar_lea.hbm %s3, %s330
          %s332 = sshll.u32 %s322, 4
          %s333 = int_to_ptr.vmem [resolvable:$true] %s332
          %338 = dma.vmem_to_hbm [thread:$0]  %s333, 1024, %s331, %s319, 512, 512, 32
        $region48: #{tpu_custom_call.1} parent=31 // pred_fallthru
          _
      $region32: #{tpu_custom_call.1} parent=5 // pred_fallthru
        _
      %p339 = scmp.le.s32.totalorder 2, %s16
      // Predicated region
      $region49: #{tpu_custom_call.1} parent=5 // pred_check
        %p340 = pneg %p339
      $region50: #{tpu_custom_call.1} parent=5 // pred_check_branch
        %342 = sbr.rel (%p340) target = $region52
      $region51: #{tpu_custom_call.1} parent=5 // pred_region
        %s343 = ssub.s32 %s16, 2
        // Predicated region
        $region53: #{tpu_custom_call.1} parent=51 // pred_check
          %p344 = pneg %p113
        $region54: #{tpu_custom_call.1} parent=51 // pred_check_branch
          %346 = sbr.rel (%p344) target = $region56
        $region55: #{tpu_custom_call.1} parent=51 // pred_region
          %s347 = sand.u32 %s98, 1
          %s348 = scalar_lea.sflag [#allocation4], %s347
          %s349 = sand.u32 %s98, 1
          %s350 = smul.addr %s349, 64
          %s351 = scalar_lea.vmem [#allocation8], %s350
          %352 = dma.done %s348, 1024
        $region56: #{tpu_custom_call.1} parent=51 // pred_fallthru
          _
      $region52: #{tpu_custom_call.1} parent=5 // pred_fallthru
        _
    $region6: #{tpu_custom_call.1} parent=1 // loop_footer
      %s20 = sadd.s32 1, %s16
    $region7: #{tpu_custom_call.1} parent=1 // loop_footer_branch
      %15 = sbr.rel target = $region3
    $region8: #{tpu_custom_call.1} parent=1 // loop_exit
      _
    %353 = vsyncpa [#allocation3], 1
    %s354 = scalar_lea.sflag [#allocation3], 1
    %355 = vsyncpa %s354, 1
    %356 = vsyncpa [#allocation6], 1
    %357 = vsyncpa [#allocation4], 1
    %s358 = scalar_lea.sflag [#allocation4], 1
    %359 = vsyncpa %s358, 1

</llo_original>
